<compile_context>
chip_gen: v7x
topology: tpu7x:2x2x1
jax: 0.10.0
libtpu: 0.0.40
codegen_flags: <defaults>
</compile_context>

<pallas_src>
import functools
import math

import jax
import jax.numpy as jnp
from jax.experimental import pallas as pl
from jax.experimental.pallas import tpu as pltpu


def _round_up(x: int, m: int) -> int:
    return (x + m - 1) // m * m


# sublane packing (rows per vreg group) per element size
_SUBLANE_PACK = {4: 8, 2: 16, 1: 32}


# ----------------------------------------------------------------------------
# Fused kernel:  out = src + positional encoding + segment encoding
#   src_ref / out_ref : (tile_s, B*D)  lane-dense 2-D slab
#   pos_ref           : (pos_rows, D)  rows of the positional table (pos_rows >= tile rows)
#   seg_ref           : (2, D)         segment embedding table
# ----------------------------------------------------------------------------
def _fused_add_kernel(src_ref, pos_ref, seg_ref, out_ref, *, batch: int):
    rows = src_ref.shape[0]            # static tile row count
    f32 = jnp.float32

    pos = pos_ref[0:rows, :].astype(f32)                          # (rows, D)
    # Bulk path: segment id 1 everywhere (full-tile, unmasked store).
    bias = pos + seg_ref[1:2, :].astype(f32)                      # (rows, D)
    bias = jnp.concatenate([bias] * batch, axis=-1)               # (rows, B*D) lane replication
    out_ref[...] = (src_ref[...].astype(f32) + bias).astype(out_ref.dtype)

    # Rows 0 and 1 of the whole sequence ([CLS] + context row) use segment id 0;
    # they live in the first grid block only.  Tiny masked overwrite.
    @pl.when(pl.program_id(0) == 0)
    def _():
        fix = pos_ref[0:2, :].astype(f32) + seg_ref[0:1, :].astype(f32)   # (2, D)
        fix = jnp.concatenate([fix] * batch, axis=-1)                     # (2, B*D)
        out_ref[0:2, :] = (src_ref[0:2, :].astype(f32) + fix).astype(out_ref.dtype)


def add_positional_and_segment_encoding(src: jax.Array,
                                        pos_enc: jax.Array,
                                        seg_table: jax.Array,
                                        utterance_lens: tuple = None,
                                        *,
                                        vmem_budget_bytes: int = 12 * 1024 * 1024
                                        ) -> jax.Array:
    """Fused `positional_encoder(src); src += segment_encoding(...)` stage.

    src      : (S, B, D)  cat(cls, context, word_embeddings) slab
    pos_enc  : (max_seq_len, 1, D) or (max_seq_len, D) positional table
    seg_table: (2, D) segment embedding table
    """
    S, B, D = src.shape
    pos2d = pos_enc.reshape(pos_enc.shape[0], pos_enc.shape[-1])
    L = pos2d.shape[0]
    assert pos2d.shape[1] == D, "positional table d_model mismatch"
    assert S <= L, f"sequence length {S} exceeds positional table rows {L}"
    assert seg_table.shape == (2, D), "segment table must be (2, d_model)"
    if utterance_lens is not None:
        assert int(max(utterance_lens)) + 2 == S, "src seq len must be max_len + 2"

    # Rare: keep the positional table 8-row aligned so an 8-aligned pos block
    # never exceeds it (no-op for the default max_seq_len=200).
    if L % 8:
        pos2d = jnp.pad(pos2d, ((0, _round_up(L, 8) - L), (0, 0)))
        L = pos2d.shape[0]

    isz_src = src.dtype.itemsize
    isz_pos = pos2d.dtype.itemsize
    pack = _SUBLANE_PACK.get(isz_src, 8)
    seg_bytes = 2 * D * seg_table.dtype.itemsize

    # ---- tile selection: single block unless double-buffered tiles bust VMEM ----
    pos_rows_full = min(_round_up(S, 8), L)
    single_est = 2 * (2 * S * B * D * isz_src + pos_rows_full * D * isz_pos) + 2 * seg_bytes
    if single_est <= vmem_budget_bytes:
        tile_s, pos_rows = S, pos_rows_full          # block == full array dims
    else:
        row_bytes = 2 * (2 * B * D * isz_src + D * isz_pos)
        tile_s = (max(vmem_budget_bytes - 2 * seg_bytes, row_bytes * pack)
                  // row_bytes) // pack * pack
        tile_s = max(tile_s, pack)
        if tile_s >= S:                              # degenerate: fall back to one block
            tile_s, pos_rows = S, pos_rows_full
        else:
            pos_rows = tile_s                        # multiple of `pack` (>= 8)
    num_blocks = pl.cdiv(S, tile_s)

    src2d = src.reshape(S, B * D)                    # free contiguous reshape

    compiler_kwargs = dict(dimension_semantics=("parallel",))
    if num_blocks > 1:
        est = 2 * (2 * tile_s * B * D * isz_src + pos_rows * D * isz_pos) + 2 * seg_bytes
        compiler_kwargs["vmem_limit_bytes"] = int(
            min(32 * 1024 * 1024, max(16 * 1024 * 1024, 2 * est)))

    out2d = pl.pallas_call(
        functools.partial(_fused_add_kernel, batch=B),
        out_shape=jax.ShapeDtypeStruct((S, B * D), src.dtype),
        grid=(num_blocks,),
        in_specs=[
            pl.BlockSpec((tile_s, B * D), lambda i: (i, 0)),   # src slab
            pl.BlockSpec((pos_rows, D), lambda i: (i, 0)),     # positional rows
            pl.BlockSpec((2, D), lambda i: (0, 0)),            # segment table (resident)
        ],
        out_specs=pl.BlockSpec((tile_s, B * D), lambda i: (i, 0)),
        input_output_aliases={0: 0},                           # logically src += bias
        compiler_params=pltpu.CompilerParams(**compiler_kwargs),
    )(src2d, pos2d, seg_table)

    return out2d.reshape(S, B, D)


# ----------------------------------------------------------------------------
# SegmentEncoding.forward parity helper — pure XLA (too small for a custom call;
# the static [0, 0, 1, ..., 1] pattern constant-folds to a broadcast/concat).
# ----------------------------------------------------------------------------
def segment_encoding(seg_table: jax.Array,
                     utterance_lens: tuple,
                     last_utterance_lens: tuple = None) -> jax.Array:
    del last_utterance_lens  # unused by the reference forward as well
    max_len = int(max(utterance_lens))
    D = seg_table.shape[1]
    return jnp.concatenate(
        [jnp.broadcast_to(seg_table[0:1, :], (2, D)),
         jnp.broadcast_to(seg_table[1:2, :], (max_len, D))],
        axis=0)                                               # (max_len + 2, D)


# ----------------------------------------------------------------------------
# PositionalEncoding buffer (same formula as the torch module's __init__).
# Note: IronyClassifier.__init__ passes dropout_p positionally as max_timescale;
# forward() only adds the precomputed buffer, so the kernel is agnostic to that.
# ----------------------------------------------------------------------------
def make_positional_encoding(d_model: int,
                             max_timescale: float = 10000.0,
                             max_seq_len: int = 200,
                             start_index: int = 0) -> jax.Array:
    position = jnp.arange(start_index, max_seq_len, dtype=jnp.float32)[:, None]
    div_term = jnp.exp(jnp.arange(0, d_model, 2, dtype=jnp.float32)
                       * (-math.log(max_timescale) / d_model))
    pe_sin = jnp.sin(div_term * position)                     # (L, d/2)
    pe_cos = jnp.cos(div_term * position)                     # (L, d/2)
    pe = jnp.stack([pe_sin, pe_cos], axis=-1).reshape(max_seq_len, d_model)
    return pe[:, None, :]                                     # (L, 1, d_model)


if __name__ == "__main__":
    # Small shapes consistent with the module; d_model lane-dense (128).
    d_model = 128
    batch = 2
    utterance_lens = (5, 8, 3)        # max_len = 8 -> seq = 10
    last_utterance_lens = (2, 4, 1)   # unused by SegmentEncoding.forward
    max_len = max(utterance_lens)
    S = max_len + 2

    key = jax.random.PRNGKey(0)
    k_emb, k_src = jax.random.split(key)
    seg_table = jax.random.normal(k_emb, (2, d_model), dtype=jnp.float32)
    # src stands in for cat(cls, context, word_embeddings): (seq, batch, d_model)
    src = jax.random.normal(k_src, (S, batch, d_model), dtype=jnp.float32)
    pos_enc = make_positional_encoding(d_model)               # (200, 1, d_model)

    # 1) SegmentEncoding parity (pure XLA, no custom call) ---------------------
    seg_rows = segment_encoding(seg_table, utterance_lens, last_utterance_lens)
    token_ids = jnp.array([0, 0] + [1] * max_len, dtype=jnp.int32)
    ref_seg = seg_table[token_ids]
    assert seg_rows.shape == (S, d_model)
    assert jnp.allclose(seg_rows, ref_seg), "segment encoding mismatch"

    # 2) Fused Pallas stage: src + positional encoding + segment encoding ------
    ref = src + pos_enc[:S] + ref_seg[:, None, :]             # reference first
    out = jax.block_until_ready(
        add_positional_and_segment_encoding(src, pos_enc, seg_table,
                                            utterance_lens))
    assert out.shape == src.shape
    assert jnp.allclose(out, ref, atol=1e-5, rtol=1e-5), "fused add mismatch"

    print("KERNEL_OK")
</pallas_src>

<mosaic_0001>
module attributes {stable_mosaic.version = 11 : i64} {
  func.func @_fused_add_kernel(%arg0: i32, %arg1: memref<10x256xf32, #tpu.memory_space<vmem>>, %arg2: memref<16x128xf32, #tpu.memory_space<vmem>>, %arg3: memref<2x128xf32, #tpu.memory_space<vmem>>, %arg4: memref<10x256xf32, #tpu.memory_space<vmem>>) attributes {dimension_semantics = [#tpu.dimension_semantics<parallel>], iteration_bounds = array<i64: 1>, scalar_prefetch = 0 : i64, scratch_operands = 0 : i64, tpu.core_type = #tpu.core_type<tc>, window_params = [{transform_indices = @transform_0, window_bounds = array<i64: 10, 256>}, {transform_indices = @transform_1, window_bounds = array<i64: 16, 128>}, {pipeline_mode = #tpu.pipeline_mode<synchronous>, transform_indices = @transform_2, window_bounds = array<i64: 2, 128>}, {transform_indices = @transform_3, window_bounds = array<i64: 10, 256>}]} {
    %c0 = arith.constant 0 : index
    %c0_0 = arith.constant 0 : index
    %0 = vector.load %arg2[%c0, %c0_0] : memref<16x128xf32, #tpu.memory_space<vmem>>, vector<10x128xf32>
    %c1 = arith.constant 1 : index
    %c0_1 = arith.constant 0 : index
    %1 = vector.load %arg3[%c1, %c0_1] : memref<2x128xf32, #tpu.memory_space<vmem>>, vector<1x128xf32>
    %2 = vector.broadcast %1 : vector<1x128xf32> to vector<10x128xf32>
    %3 = arith.addf %0, %2 : vector<10x128xf32>
    %4 = tpu.concatenate %3, %3 in 1 : vector<10x128xf32>, vector<10x128xf32> -> vector<10x256xf32>
    %c0_2 = arith.constant 0 : index
    %c0_3 = arith.constant 0 : index
    %5 = vector.load %arg1[%c0_2, %c0_3] : memref<10x256xf32, #tpu.memory_space<vmem>>, vector<10x256xf32>
    %6 = arith.addf %5, %4 : vector<10x256xf32>
    %c0_4 = arith.constant 0 : index
    %c0_5 = arith.constant 0 : index
    %7 = vector.load %arg4[%c0_4, %c0_5] : memref<10x256xf32, #tpu.memory_space<vmem>>, vector<10x256xf32>
    tpu.vector_store %arg4[%c0_4, %c0_5], %6 {strides = array<i32>} : memref<10x256xf32, #tpu.memory_space<vmem>>, vector<10x256xf32>,
    %c0_i32 = arith.constant 0 : i32
    %8 = arith.cmpi eq, %arg0, %c0_i32 : i32
    %9 = arith.extui %8 : i1 to i32
    %c0_i32_6 = arith.constant 0 : i32
    %10 = arith.cmpi ne, %9, %c0_i32_6 : i32
    scf.if %10 {
      %c0_7 = arith.constant 0 : index
      %c0_8 = arith.constant 0 : index
      %11 = vector.load %arg2[%c0_7, %c0_8] : memref<16x128xf32, #tpu.memory_space<vmem>>, vector<2x128xf32>
      %c0_9 = arith.constant 0 : index
      %c0_10 = arith.constant 0 : index
      %12 = vector.load %arg3[%c0_9, %c0_10] : memref<2x128xf32, #tpu.memory_space<vmem>>, vector<1x128xf32>
      %13 = vector.broadcast %12 : vector<1x128xf32> to vector<2x128xf32>
      %14 = arith.addf %11, %13 : vector<2x128xf32>
      %15 = tpu.concatenate %14, %14 in 1 : vector<2x128xf32>, vector<2x128xf32> -> vector<2x256xf32>
      %c0_11 = arith.constant 0 : index
      %c0_12 = arith.constant 0 : index
      %16 = vector.load %arg1[%c0_11, %c0_12] : memref<10x256xf32, #tpu.memory_space<vmem>>, vector<2x256xf32>
      %17 = arith.addf %16, %15 : vector<2x256xf32>
      %c0_13 = arith.constant 0 : index
      %c0_14 = arith.constant 0 : index
      %18 = vector.load %arg4[%c0_13, %c0_14] : memref<10x256xf32, #tpu.memory_space<vmem>>, vector<2x256xf32>
      tpu.vector_store %arg4[%c0_13, %c0_14], %17 {strides = array<i32>} : memref<10x256xf32, #tpu.memory_space<vmem>>, vector<2x256xf32>,
    } else {
    }
    return
  }
  func.func @transform_0(%arg0: i32) -> (i32, i32) {
    %c0_i32 = arith.constant 0 : i32
    %c0_i32_0 = arith.constant 0 : i32
    return %arg0, %c0_i32 : i32, i32
  }
  func.func @transform_1(%arg0: i32) -> (i32, i32) {
    %c0_i32 = arith.constant 0 : i32
    %c0_i32_0 = arith.constant 0 : i32
    return %arg0, %c0_i32 : i32, i32
  }
  func.func @transform_2(%arg0: i32) -> (i32, i32) {
    %c0_i32 = arith.constant 0 : i32
    %c0_i32_0 = arith.constant 0 : i32
    %c0_i32_1 = arith.constant 0 : i32
    return %c0_i32, %c0_i32_0 : i32, i32
  }
  func.func @transform_3(%arg0: i32) -> (i32, i32) {
    %c0_i32 = arith.constant 0 : i32
    %c0_i32_0 = arith.constant 0 : i32
    return %arg0, %c0_i32 : i32, i32
  }
}

</mosaic_0001>

<llo_original>
// kernel: tpu_custom_call.1
$region0: #{tpu_custom_call.1}
  #allocation0 [shape = 'u32[]', space=smem, size = 0x4, offset = 0x4, fixed_abs, tag = 'smem constant byte address 0x4 - core index']
  #allocation1 [shape = 'u32[144,128]{1,0:T(1,128)}', space=vmem, size = 0x12000, scoped, tag = 'internal scratch']
  %s0 = inlined_call_operand.hbm [shape: f32[10,256], index: 0, kind: input, shape index: {}, may-alias: {0,3}]
  %s1 = inlined_call_operand.hbm [shape: f32[200,128], index: 1, kind: input, shape index: {}]
  %s2 = inlined_call_operand.vmem [shape: f32[2,128], index: 2, kind: input, shape index: {}]
  %s3 = inlined_call_operand.hbm [shape: f32[10,256], index: 3, kind: output, shape index: {}, may-alias: {0,3}]
  %s4 = sld [smem:[#allocation0]]
  $region34: #{tpu_custom_call.1} parent=0
    _
  %s6 = ssub.s32 1, %s4
  %s7 = scalar_select 0, %s6, %s4
  $region1: #{tpu_custom_call.1} parent=0
    #allocation2 [shape = 'u8[16384]{0}', space=vmem, size = 0x4000, scoped, tag = 'input window, operand 0, single buffered']
    #allocation3 [shape = 's32[1]{0}', space=sflag, size = 0x4, scoped, tag = 'scoped memory for tpu_custom_call.1']
    #allocation4 [shape = 's32[1]{0}', space=sflag, size = 0x4, scoped, tag = 'scoped memory for tpu_custom_call.1']
    #allocation5 [shape = 'u8[8192]{0}', space=vmem, size = 0x2000, scoped, tag = 'input window, operand 1, single buffered']
    #allocation6 [shape = 's32[1]{0}', space=sflag, size = 0x4, scoped, tag = 'scoped memory for tpu_custom_call.1']
    #allocation7 [shape = 'u8[16384]{0}', space=vmem, size = 0x4000, scoped, tag = 'output window, operand 0, single buffered']
    %8 = vsyncpa [#allocation3], 0
    %9 = vsyncpa [#allocation6], 0
    %10 = vsyncpa [#allocation4], 0
    // Predicated region
    $region2: #{tpu_custom_call.1} parent=1 // pred_check
      _
    $region3: #{tpu_custom_call.1} parent=1 // pred_check_branch
      %12 = sbr.rel (0) target = $region5
    $region4: #{tpu_custom_call.1} parent=1 // pred_region
      %s14 = ssub.s32 512, 512
      %15 = vsyncadd [#allocation3], %s14
      %s16 = sshll.u32 [#allocation2], 4
      %s17 = int_to_ptr.vmem [resolvable:$true] %s16
      %22 = dma.hbm_to_vmem [thread:$0]  %s0, 512, %s17, [#allocation3], 256, 256, 16
    $region5: #{tpu_custom_call.1} parent=1 // pred_fallthru
      _
    // Predicated region
    $region6: #{tpu_custom_call.1} parent=1 // pred_check
      _
    $region7: #{tpu_custom_call.1} parent=1 // pred_check_branch
      %24 = sbr.rel (0) target = $region9
    $region8: #{tpu_custom_call.1} parent=1 // pred_region
      %s26 = ssub.s32 256, 256
      %27 = vsyncadd [#allocation6], %s26
      %s28 = sshll.u32 [#allocation5], 4
      %s29 = int_to_ptr.vmem [resolvable:$true] %s28
      %34 = dma.hbm_to_vmem [thread:$0]  %s1, 256, %s29, [#allocation6], 128, 128, 8
    $region9: #{tpu_custom_call.1} parent=1 // pred_fallthru
      _
    // Predicated region
    $region10: #{tpu_custom_call.1} parent=1 // pred_check
      _
    $region11: #{tpu_custom_call.1} parent=1 // pred_check_branch
      %36 = sbr.rel (0) target = $region13
    $region12: #{tpu_custom_call.1} parent=1 // pred_region
      _
    $region13: #{tpu_custom_call.1} parent=1 // pred_fallthru
      _
    // Predicated region
    $region14: #{tpu_custom_call.1} parent=1 // pred_check
      _
    $region15: #{tpu_custom_call.1} parent=1 // pred_check_branch
      %38 = sbr.rel (0) target = $region17
    $region16: #{tpu_custom_call.1} parent=1 // pred_region
      %39 = dma.done [#allocation3], 512
    $region17: #{tpu_custom_call.1} parent=1 // pred_fallthru
      _
    // Predicated region
    $region18: #{tpu_custom_call.1} parent=1 // pred_check
      _
    $region19: #{tpu_custom_call.1} parent=1 // pred_check_branch
      %41 = sbr.rel (0) target = $region21
    $region20: #{tpu_custom_call.1} parent=1 // pred_region
      %42 = dma.done [#allocation6], 256
    $region21: #{tpu_custom_call.1} parent=1 // pred_fallthru
      _
    %v43 = vld [vmem:[#allocation5] sm:$0xff]
    %v44 = vld [vmem:[#allocation5 + $0x8] sm:$0x3]
    %v45 = vld [vmem:[%s2 + $0x1] sm:$0x1]
    %v46 = vlaneseq
    %v47 = vshrl.u32 %v46, 7
    %v48 = vsub.s32 0, %v47
    %v49 = vrot.slane %v45, %v48
    %v50 = vadd.f32 %v43, %v49
    %v51 = vadd.f32 %v44, %v49
    %v52 = vld [vmem:[#allocation2] sm:$0xff]
    %v53 = vld [vmem:[#allocation2 + $0x8] sm:$0xff]
    %v54 = vld [vmem:[#allocation2 + $0x10] sm:$0x3]
    %v55 = vld [vmem:[#allocation2 + $0x18] sm:$0x3]
    %v56 = vadd.f32 %v52, %v50
    %v57 = vadd.f32 %v53, %v50
    %v58 = vadd.f32 %v54, %v51
    %v59 = vadd.f32 %v55, %v51
    %60 = vst [vmem:[#allocation7] sm:$0xff] %v56
    %61 = vst [vmem:[#allocation7 + $0x8] sm:$0xff] %v57
    %62 = vst [vmem:[#allocation7 + $0x10] sm:$0x3] %v58
    %63 = vst [vmem:[#allocation7 + $0x18] sm:$0x3] %v59
    %p64 = scmp.eq.s32.totalorder 0, 0
    // Predicated region
    $region22: #{tpu_custom_call.1} parent=1 // pred_check
      %p65 = pneg %p64
    $region23: #{tpu_custom_call.1} parent=1 // pred_check_branch
      %67 = sbr.rel (%p65) target = $region25
    $region24: #{tpu_custom_call.1} parent=1 // pred_region
      %v68 = vld [vmem:[#allocation5] sm:$0x3]
      %v69 = vld [vmem:[%s2] sm:$0x1]
      %v70 = vlaneseq
      %v71 = vshrl.u32 %v70, 7
      %v72 = vsub.s32 0, %v71
      %v73 = vrot.slane %v69, %v72
      %v74 = vadd.f32 %v68, %v73
      %v75 = vld [vmem:[#allocation2] sm:$0x3]
      %v76 = vld [vmem:[#allocation2 + $0x8] sm:$0x3]
      %v77 = vadd.f32 %v75, %v74
      %v78 = vadd.f32 %v76, %v74
      %79 = vst [vmem:[#allocation7] sm:$0x3] %v77
      %80 = vst [vmem:[#allocation7 + $0x8] sm:$0x3] %v78
    $region25: #{tpu_custom_call.1} parent=1 // pred_fallthru
      _
    // Predicated region
    $region26: #{tpu_custom_call.1} parent=1 // pred_check
      _
    $region27: #{tpu_custom_call.1} parent=1 // pred_check_branch
      %82 = sbr.rel (0) target = $region29
    $region28: #{tpu_custom_call.1} parent=1 // pred_region
      %s84 = ssub.s32 512, 512
      %85 = vsyncadd [#allocation4], %s84
      %s86 = sshll.u32 [#allocation7], 4
      %s87 = int_to_ptr.vmem [resolvable:$true] %s86
      %92 = dma.vmem_to_hbm [thread:$0]  %s87, 512, %s3, [#allocation4], 256, 256, 16
    $region29: #{tpu_custom_call.1} parent=1 // pred_fallthru
      _
    // Predicated region
    $region30: #{tpu_custom_call.1} parent=1 // pred_check
      _
    $region31: #{tpu_custom_call.1} parent=1 // pred_check_branch
      %94 = sbr.rel (0) target = $region33
    $region32: #{tpu_custom_call.1} parent=1 // pred_region
      %95 = dma.done [#allocation4], 512
    $region33: #{tpu_custom_call.1} parent=1 // pred_fallthru
      _
    %96 = vsyncpa [#allocation3], 1
    %97 = vsyncpa [#allocation6], 1
    %98 = vsyncpa [#allocation4], 1

</llo_original>
